<compile_context>
chip_gen: v7x
topology: tpu7x:2x2x1
jax: 0.10.0
libtpu: 0.0.40
codegen_flags: <defaults>
</compile_context>

<pallas_src>
import functools

import jax
import jax.numpy as jnp
from jax import lax
from jax.experimental import pallas as pl
from jax.experimental.pallas import tpu as pltpu


# ---------------------------------------------------------------------------
# Fused kernel: 3x3 conv (taps folded into contraction) + BN shift + 1x1 conv
#               + bias + sigmoid, one M-tile per grid step.
# ---------------------------------------------------------------------------
def _outsigmoid_kernel(pt_ref, w1t_ref, shift_ref, w2_ref, b2_ref, o_ref):
    # pt_ref   : (KC, TM)  bf16 -- im2col patches, pixels on lanes
    # w1t_ref  : (OC, KC)  bf16 -- conv1 weights with BN scale folded in
    # shift_ref: (OC, 1)   f32  -- BN shift  (beta - mean * scale)
    # w2_ref   : (OC, 1)   f32  -- 1x1 conv weights
    # b2_ref   : (1, 1)    f32  -- 1x1 conv bias
    # o_ref    : (1, TM)   f32  -- sigmoid output, lane-dense
    h = jnp.dot(w1t_ref[...], pt_ref[...],
                preferred_element_type=jnp.float32)           # (OC, TM)  MXU
    h = h + shift_ref[...]                                    # BN shift  VPU
    z = jnp.sum(h * w2_ref[...], axis=0, keepdims=True)       # 1x1 conv  VPU+XLU
    z = z + b2_ref[...]
    # numerically-stable sigmoid from ops with guaranteed Mosaic lowerings
    ez = jnp.exp(-jnp.abs(z))                                 # EUP
    o_ref[...] = jnp.where(z >= 0.0, 1.0 / (1.0 + ez), ez / (1.0 + ez))


@functools.lru_cache(maxsize=None)
def _make_outsigmoid_call(KC, OC, TM, n_tiles):
    mp = TM * n_tiles
    return pl.pallas_call(
        _outsigmoid_kernel,
        out_shape=jax.ShapeDtypeStruct((1, mp), jnp.float32),
        grid=(n_tiles,),
        in_specs=[
            pl.BlockSpec((KC, TM), lambda i: (0, i)),   # patch stream over M
            pl.BlockSpec((OC, KC), lambda i: (0, 0)),   # weights: resident
            pl.BlockSpec((OC, 1), lambda i: (0, 0)),
            pl.BlockSpec((OC, 1), lambda i: (0, 0)),
            pl.BlockSpec((1, 1), lambda i: (0, 0)),
        ],
        out_specs=pl.BlockSpec((1, TM), lambda i: (0, i)),
        compiler_params=pltpu.CompilerParams(
            dimension_semantics=("parallel",),          # megacore-shard M (v7x)
            vmem_limit_bytes=32 * 1024 * 1024,
        ),
    )


def out_sigmoid_forward(params, x_nchw, *, tile_m=256):
    """OutSigmoid forward. x_nchw: (N, Cin, H, W) -> (N, 1, H, W) float32."""
    w1 = params["w1"]                           # (OC, Cin, 3, 3), bias=False
    gamma, beta, mean, var, eps = params["bn"]  # eval-mode BatchNorm2d
    w2 = params["w2"]                           # (1, OC, 1, 1)
    b2 = params["b2"]                           # (1,)

    x = jnp.transpose(x_nchw, (0, 2, 3, 1)).astype(jnp.float32)   # NHWC
    N, H, W, Cin = x.shape
    OC = w1.shape[0]
    KC = 9 * Cin
    M = N * H * W

    # -- XLA glue: shifted 3x3 windows with taps folded into the contraction
    #    dim, transposed so pixels become the lane dimension.
    xp = jnp.pad(x, ((0, 0), (1, 1), (1, 1), (0, 0)))
    cols = []
    for dy in range(3):
        for dx in range(3):
            cols.append(xp[:, dy:dy + H, dx:dx + W, :].reshape(M, Cin))
    patches = jnp.concatenate(cols, axis=-1)          # (M, KC)
    pt = patches.T                                    # (KC, M): pixels on lanes

    # -- fold eval-mode BatchNorm scale into the conv weights (conv1 has no bias)
    scale = gamma / jnp.sqrt(var + eps)               # (OC,)
    shift = (beta - mean * scale).reshape(OC, 1)      # (OC, 1)
    wm = jnp.transpose(w1, (2, 3, 1, 0)).reshape(KC, OC)
    w1t = (wm * scale[None, :]).T                     # (OC, KC)

    # -- lane-dense M tiling (pad M up to a multiple of the tile)
    TM = int(tile_m)
    n_tiles = -(-M // TM)
    mp = n_tiles * TM
    if mp != M:
        pt = jnp.pad(pt, ((0, 0), (0, mp - M)))

    out = _make_outsigmoid_call(KC, OC, TM, n_tiles)(
        pt.astype(jnp.bfloat16),
        w1t.astype(jnp.bfloat16),
        shift.astype(jnp.float32),
        w2.reshape(OC, 1).astype(jnp.float32),
        b2.reshape(1, 1).astype(jnp.float32),
    )                                                 # (1, mp)

    y = out[:, :M].reshape(N, H, W, 1)
    return jnp.transpose(y, (0, 3, 1, 2))             # back to NCHW


# ---------------------------------------------------------------------------
# Pure-JAX (XLA) reference + deterministic parameter construction
# ---------------------------------------------------------------------------
def out_sigmoid_reference(params, x_nchw):
    w1 = params["w1"]
    gamma, beta, mean, var, eps = params["bn"]
    w2 = params["w2"]
    b2 = params["b2"]
    h = lax.conv_general_dilated(
        x_nchw.astype(jnp.float32), w1, (1, 1), ((1, 1), (1, 1)),
        dimension_numbers=("NCHW", "OIHW", "NCHW"))
    scale = (gamma / jnp.sqrt(var + eps))[None, :, None, None]
    shift = (beta - mean * gamma / jnp.sqrt(var + eps))[None, :, None, None]
    h = h * scale + shift
    z = lax.conv_general_dilated(
        h, w2, (1, 1), ((0, 0), (0, 0)),
        dimension_numbers=("NCHW", "OIHW", "NCHW"))
    z = z + b2[None, :, None, None]
    return jax.nn.sigmoid(z)


def init_outsigmoid_params(key, inp_planes, out_c=8):
    ks = jax.random.split(key, 7)
    w1 = (0.2 / (inp_planes * 9) ** 0.5) * jax.random.normal(
        ks[0], (out_c, inp_planes, 3, 3), jnp.float32)
    gamma = 1.0 + 0.1 * jax.random.normal(ks[1], (out_c,), jnp.float32)
    beta = 0.1 * jax.random.normal(ks[2], (out_c,), jnp.float32)
    mean = 0.1 * jax.random.normal(ks[3], (out_c,), jnp.float32)
    var = 1.0 + 0.1 * jnp.abs(jax.random.normal(ks[4], (out_c,), jnp.float32))
    w2 = (0.2 / out_c ** 0.5) * jax.random.normal(ks[5], (1, out_c, 1, 1), jnp.float32)
    b2 = 0.05 * jax.random.normal(ks[6], (1,), jnp.float32)
    return {"w1": w1, "bn": (gamma, beta, mean, var, 1e-5), "w2": w2, "b2": b2}


if __name__ == "__main__":
    key = jax.random.PRNGKey(0)
    k_param, k_input = jax.random.split(key)

    inp_planes, out_c = 4, 8
    params = init_outsigmoid_params(k_param, inp_planes, out_c)
    x = jax.random.normal(k_input, (2, inp_planes, 16, 16), dtype=jnp.float32)  # NCHW

    fwd = jax.jit(out_sigmoid_forward)
    out = jax.block_until_ready(fwd(params, x))
    ref = jax.block_until_ready(out_sigmoid_reference(params, x))

    assert out.shape == (2, 1, 16, 16), out.shape
    assert bool(jnp.all(jnp.isfinite(out)))
    assert bool(jnp.all((out >= 0.0) & (out <= 1.0)))       # sigmoid range
    max_err = float(jnp.max(jnp.abs(out - ref)))
    assert max_err < 1e-2, f"mismatch vs XLA reference: {max_err}"
    print("KERNEL_OK")
</pallas_src>

<mosaic_0001>
module attributes {stable_mosaic.version = 11 : i64} {
  func.func @_outsigmoid_kernel(%arg0: i32, %arg1: memref<36x256xbf16, #tpu.memory_space<vmem>>, %arg2: memref<8x36xbf16, #tpu.memory_space<vmem>>, %arg3: memref<8x1xf32, #tpu.memory_space<vmem>>, %arg4: memref<8x1xf32, #tpu.memory_space<vmem>>, %arg5: memref<1x1xf32, #tpu.memory_space<vmem>>, %arg6: memref<1x256xf32, #tpu.memory_space<vmem>>) attributes {dimension_semantics = [#tpu.dimension_semantics<parallel>], iteration_bounds = array<i64: 2>, scalar_prefetch = 0 : i64, scratch_operands = 0 : i64, tpu.core_type = #tpu.core_type<tc>, window_params = [{transform_indices = @transform_0, window_bounds = array<i64: 36, 256>}, {pipeline_mode = #tpu.pipeline_mode<synchronous>, transform_indices = @transform_1, window_bounds = array<i64: 8, 36>}, {pipeline_mode = #tpu.pipeline_mode<synchronous>, transform_indices = @transform_2, window_bounds = array<i64: 8, 1>}, {pipeline_mode = #tpu.pipeline_mode<synchronous>, transform_indices = @transform_3, window_bounds = array<i64: 8, 1>}, {pipeline_mode = #tpu.pipeline_mode<synchronous>, transform_indices = @transform_4, window_bounds = array<i64: 1, 1>}, {transform_indices = @transform_5, window_bounds = array<i64: 1, 256>}]} {
    %c0 = arith.constant 0 : index
    %c0_0 = arith.constant 0 : index
    %0 = vector.load %arg2[%c0, %c0_0] : memref<8x36xbf16, #tpu.memory_space<vmem>>, vector<8x36xbf16>
    %c0_1 = arith.constant 0 : index
    %c0_2 = arith.constant 0 : index
    %1 = vector.load %arg1[%c0_1, %c0_2] : memref<36x256xbf16, #tpu.memory_space<vmem>>, vector<36x256xbf16>
    %cst = arith.constant dense<0.000000e+00> : vector<8x256xf32>
    %2 = tpu.matmul %0, %1, %cst {dimension_numbers = #tpu.dot_dimension_numbers<[1], [0], [0], [1], [0, 0, 1, 1], [], []>} : vector<8x36xbf16>, vector<36x256xbf16>, vector<8x256xf32> -> vector<8x256xf32>
    %c0_3 = arith.constant 0 : index
    %c0_4 = arith.constant 0 : index
    %3 = vector.load %arg3[%c0_3, %c0_4] : memref<8x1xf32, #tpu.memory_space<vmem>>, vector<8x1xf32>
    %4 = vector.broadcast %3 : vector<8x1xf32> to vector<8x256xf32>
    %5 = arith.addf %2, %4 : vector<8x256xf32>
    %c0_5 = arith.constant 0 : index
    %c0_6 = arith.constant 0 : index
    %6 = vector.load %arg4[%c0_5, %c0_6] : memref<8x1xf32, #tpu.memory_space<vmem>>, vector<8x1xf32>
    %7 = vector.broadcast %6 : vector<8x1xf32> to vector<8x256xf32>
    %8 = arith.mulf %5, %7 : vector<8x256xf32>
    %cst_7 = arith.constant dense<0.000000e+00> : vector<256xf32>
    %9 = vector.multi_reduction <add>, %8, %cst_7 [0] : vector<8x256xf32> to vector<256xf32>
    %10 = vector.shape_cast %9 : vector<256xf32> to vector<1x256xf32>
    %c0_8 = arith.constant 0 : index
    %c0_9 = arith.constant 0 : index
    %11 = vector.load %arg5[%c0_8, %c0_9] : memref<1x1xf32, #tpu.memory_space<vmem>>, vector<1x1xf32>
    %12 = vector.broadcast %11 : vector<1x1xf32> to vector<1x256xf32>
    %13 = arith.addf %10, %12 : vector<1x256xf32>
    %14 = math.absf %13 : vector<1x256xf32>
    %cst_10 = arith.constant 0.000000e+00 : f32
    %15 = vector.broadcast %cst_10 : f32 to vector<1x256xf32>
    %16 = arith.subf %15, %14 : vector<1x256xf32>
    %17 = math.exp %16 : vector<1x256xf32>
    %cst_11 = arith.constant 0.000000e+00 : f32
    %18 = vector.broadcast %cst_11 : f32 to vector<1x256xf32>
    %19 = arith.cmpf oge, %13, %18 : vector<1x256xf32>
    %cst_12 = arith.constant 1.000000e+00 : f32
    %20 = vector.broadcast %cst_12 : f32 to vector<1x256xf32>
    %21 = arith.addf %20, %17 : vector<1x256xf32>
    %cst_13 = arith.constant 1.000000e+00 : f32
    %22 = vector.broadcast %cst_13 : f32 to vector<1x256xf32>
    %23 = arith.divf %22, %21 : vector<1x256xf32>
    %cst_14 = arith.constant 1.000000e+00 : f32
    %24 = vector.broadcast %cst_14 : f32 to vector<1x256xf32>
    %25 = arith.addf %24, %17 : vector<1x256xf32>
    %26 = arith.divf %17, %25 : vector<1x256xf32>
    %27 = arith.select %19, %23, %26 : vector<1x256xi1>, vector<1x256xf32>
    %c0_15 = arith.constant 0 : index
    %c0_16 = arith.constant 0 : index
    %28 = vector.load %arg6[%c0_15, %c0_16] : memref<1x256xf32, #tpu.memory_space<vmem>>, vector<1x256xf32>
    tpu.vector_store %arg6[%c0_15, %c0_16], %27 {strides = array<i32>} : memref<1x256xf32, #tpu.memory_space<vmem>>, vector<1x256xf32>,
    return
  }
  func.func @transform_0(%arg0: i32) -> (i32, i32) {
    %c0_i32 = arith.constant 0 : i32
    %c0_i32_0 = arith.constant 0 : i32
    return %c0_i32, %arg0 : i32, i32
  }
  func.func @transform_1(%arg0: i32) -> (i32, i32) {
    %c0_i32 = arith.constant 0 : i32
    %c0_i32_0 = arith.constant 0 : i32
    %c0_i32_1 = arith.constant 0 : i32
    return %c0_i32, %c0_i32_0 : i32, i32
  }
  func.func @transform_2(%arg0: i32) -> (i32, i32) {
    %c0_i32 = arith.constant 0 : i32
    %c0_i32_0 = arith.constant 0 : i32
    %c0_i32_1 = arith.constant 0 : i32
    return %c0_i32, %c0_i32_0 : i32, i32
  }
  func.func @transform_3(%arg0: i32) -> (i32, i32) {
    %c0_i32 = arith.constant 0 : i32
    %c0_i32_0 = arith.constant 0 : i32
    %c0_i32_1 = arith.constant 0 : i32
    return %c0_i32, %c0_i32_0 : i32, i32
  }
  func.func @transform_4(%arg0: i32) -> (i32, i32) {
    %c0_i32 = arith.constant 0 : i32
    %c0_i32_0 = arith.constant 0 : i32
    %c0_i32_1 = arith.constant 0 : i32
    return %c0_i32, %c0_i32_0 : i32, i32
  }
  func.func @transform_5(%arg0: i32) -> (i32, i32) {
    %c0_i32 = arith.constant 0 : i32
    %c0_i32_0 = arith.constant 0 : i32
    return %c0_i32, %arg0 : i32, i32
  }
}

</mosaic_0001>

<llo_original>
// kernel: out_sigmoid_forward.1
$region0: #{out_sigmoid_forward.1}
  #allocation0 [shape = 'u32[]', space=smem, size = 0x4, offset = 0x4, fixed_abs, tag = 'smem constant byte address 0x4 - core index']
  #allocation1 [shape = 'u32[144,128]{1,0:T(1,128)}', space=vmem, size = 0x12000, scoped, tag = 'internal scratch']
  #allocation2 [shape = 'f32[1,1]{1,0:T(1,128)S(1)}', space=vmem, size = 0x200, scoped, tag = 'scoped memory for out_sigmoid_forward.1']
  %s0 = inlined_call_operand.vmem [shape: bf16[36,512], index: 0, kind: input, shape index: {}]
  %s1 = inlined_call_operand.vmem [shape: bf16[8,36], index: 1, kind: input, shape index: {}]
  %s2 = inlined_call_operand.vmem [shape: f32[8,1], index: 2, kind: input, shape index: {}]
  %s3 = inlined_call_operand.vmem [shape: f32[8,1], index: 3, kind: input, shape index: {}]
  %s4 = inlined_call_operand.<no memory space> [shape: f32[1,1], index: 4, kind: input, shape index: {}]
  %s5 = inlined_call_operand.vmem [shape: f32[1,512], index: 5, kind: output, shape index: {}]
  %s6 = sld [smem:[#allocation0]]
  $region91: #{out_sigmoid_forward.1} parent=0
    _
  %s8 = ssub.s32 1, %s6
  %s9 = scalar_select 0, %s8, %s6
  %v10 = vstv %s4
  %11 = vst [vmem:[#allocation2] sm:$0x1] %v10
  $region1: #{out_sigmoid_forward.1} parent=0
    #allocation3 [shape = 'u8[40960]{0}', space=vmem, size = 0xa000, scoped, tag = 'input window, operand 0']
    loop: start=0, step=1, limit=4
    $region2: #{out_sigmoid_forward.1} parent=1 // loop_pre_header
      _
    $region3: #{out_sigmoid_forward.1} parent=1 // loop_header
      %s13 = sphi 0, %s17
      %p14 = scmp.ge.s32.totalorder %s13, 4
      %s23 = sphi 0, %s25
      %s26 = sphi 0, %s23
      %s27 = sphi 0, %s26
      %s43 = sphi 0, %s27
      %s47 = sphi 0, %s47
      %s49 = sphi 0, %s47
      %s50 = sphi 0, %s49
      %s64 = sphi 0, %s50
      %s68 = sphi 0, %s68
      %s70 = sphi 0, %s68
      %s71 = sphi 0, %s70
      %s85 = sphi 0, %s71
      %s89 = sphi 0, %s89
      %s91 = sphi 0, %s89
      %s92 = sphi 0, %s91
      %s106 = sphi 0, %s92
      %s110 = sphi 0, %s110
      %s112 = sphi 0, %s110
      %s113 = sphi 0, %s112
      %s127 = sphi 0, %s113
      %s133 = sphi 0, %s135
      %s136 = sphi 0, %s133
      %s137 = sphi 0, %s136
      %s153 = sphi 0, %s137
    $region4: #{out_sigmoid_forward.1} parent=1 // loop_header_branch
      %16 = sbr.rel (%p14) target = $region8
    $region5: #{out_sigmoid_forward.1} parent=1 // loop_body
      %s18 = ssub.s32 %s13, 1
      %s19 = ssub.s32 %s13, 2
      %s20 = sadd.s32 %s13, 1
      %s21 = ssub.s32 %s13, %s20
      %p22 = scmp.eq.s32.totalorder %s21, 0
      %s24 = sadd.s32 %s23, 1
      %s25 = scalar_select %p22, %s23, %s24
      %p28 = pneg %p22
      %p29 = scmp.eq.s32.totalorder %s13, 1
      %p30 = por %p28, %p29
      %p31 = scmp.ne.s32.totalorder %s23, %s26
      %p32 = scmp.eq.s32.totalorder %s13, 0
      %p33 = por %p31, %p32
      %p34 = scmp.ne.s32.totalorder %s23, %s26
      %p35 = scmp.eq.s32.totalorder %s18, 1
      %p36 = por %p34, %p35
      %p37 = scmp.ne.s32.totalorder %s26, %s27
      %p38 = scmp.eq.s32.totalorder %s18, 0
      %p39 = por %p37, %p38
      %p40 = scmp.ne.s32.totalorder %s26, %s27
      %p41 = scmp.eq.s32.totalorder %s19, 1
      %p42 = por %p40, %p41
      %p44 = scmp.ne.s32.totalorder %s27, %s43
      %p45 = scmp.eq.s32.totalorder %s19, 0
      %p46 = por %p44, %p45
      %s48 = sadd.s32 %s47, 1
      %p51 = scmp.eq.s32.totalorder %s13, 1
      %p52 = scmp.ne.s32.totalorder %s47, %s49
      %p53 = scmp.eq.s32.totalorder %s13, 0
      %p54 = por %p52, %p53
      %p55 = scmp.ne.s32.totalorder %s47, %s49
      %p56 = scmp.eq.s32.totalorder %s18, 1
      %p57 = por %p55, %p56
      %p58 = scmp.ne.s32.totalorder %s49, %s50
      %p59 = scmp.eq.s32.totalorder %s18, 0
      %p60 = por %p58, %p59
      %p61 = scmp.ne.s32.totalorder %s49, %s50
      %p62 = scmp.eq.s32.totalorder %s19, 1
      %p63 = por %p61, %p62
      %p65 = scmp.ne.s32.totalorder %s50, %s64
      %p66 = scmp.eq.s32.totalorder %s19, 0
      %p67 = por %p65, %p66
      %s69 = sadd.s32 %s68, 1
      %p72 = scmp.eq.s32.totalorder %s13, 1
      %p73 = scmp.ne.s32.totalorder %s68, %s70
      %p74 = scmp.eq.s32.totalorder %s13, 0
      %p75 = por %p73, %p74
      %p76 = scmp.ne.s32.totalorder %s68, %s70
      %p77 = scmp.eq.s32.totalorder %s18, 1
      %p78 = por %p76, %p77
      %p79 = scmp.ne.s32.totalorder %s70, %s71
      %p80 = scmp.eq.s32.totalorder %s18, 0
      %p81 = por %p79, %p80
      %p82 = scmp.ne.s32.totalorder %s70, %s71
      %p83 = scmp.eq.s32.totalorder %s19, 1
      %p84 = por %p82, %p83
      %p86 = scmp.ne.s32.totalorder %s71, %s85
      %p87 = scmp.eq.s32.totalorder %s19, 0
      %p88 = por %p86, %p87
      %s90 = sadd.s32 %s89, 1
      %p93 = scmp.eq.s32.totalorder %s13, 1
      %p94 = scmp.ne.s32.totalorder %s89, %s91
      %p95 = scmp.eq.s32.totalorder %s13, 0
      %p96 = por %p94, %p95
      %p97 = scmp.ne.s32.totalorder %s89, %s91
      %p98 = scmp.eq.s32.totalorder %s18, 1
      %p99 = por %p97, %p98
      %p100 = scmp.ne.s32.totalorder %s91, %s92
      %p101 = scmp.eq.s32.totalorder %s18, 0
      %p102 = por %p100, %p101
      %p103 = scmp.ne.s32.totalorder %s91, %s92
      %p104 = scmp.eq.s32.totalorder %s19, 1
      %p105 = por %p103, %p104
      %p107 = scmp.ne.s32.totalorder %s92, %s106
      %p108 = scmp.eq.s32.totalorder %s19, 0
      %p109 = por %p107, %p108
      %s111 = sadd.s32 %s110, 1
      %p114 = scmp.eq.s32.totalorder %s13, 1
      %p115 = scmp.ne.s32.totalorder %s110, %s112
      %p116 = scmp.eq.s32.totalorder %s13, 0
      %p117 = por %p115, %p116
      %p118 = scmp.ne.s32.totalorder %s110, %s112
      %p119 = scmp.eq.s32.totalorder %s18, 1
      %p120 = por %p118, %p119
      %p121 = scmp.ne.s32.totalorder %s112, %s113
      %p122 = scmp.eq.s32.totalorder %s18, 0
      %p123 = por %p121, %p122
      %p124 = scmp.ne.s32.totalorder %s112, %s113
      %p125 = scmp.eq.s32.totalorder %s19, 1
      %p126 = por %p124, %p125
      %p128 = scmp.ne.s32.totalorder %s113, %s127
      %p129 = scmp.eq.s32.totalorder %s19, 0
      %p130 = por %p128, %p129
      %s131 = ssub.s32 %s13, %s20
      %p132 = scmp.eq.s32.totalorder %s131, 0
      %s134 = sadd.s32 %s133, 1
      %s135 = scalar_select %p132, %s133, %s134
      %p138 = pneg %p132
      %p139 = scmp.eq.s32.totalorder %s13, 1
      %p140 = por %p138, %p139
      %p141 = scmp.ne.s32.totalorder %s133, %s136
      %p142 = scmp.eq.s32.totalorder %s13, 0
      %p143 = por %p141, %p142
      %p144 = scmp.ne.s32.totalorder %s133, %s136
      %p145 = scmp.eq.s32.totalorder %s18, 1
      %p146 = por %p144, %p145
      %p147 = scmp.ne.s32.totalorder %s136, %s137
      %p148 = scmp.eq.s32.totalorder %s18, 0
      %p149 = por %p147, %p148
      %p150 = scmp.ne.s32.totalorder %s136, %s137
      %p151 = scmp.eq.s32.totalorder %s19, 1
      %p152 = por %p150, %p151
      %p154 = scmp.ne.s32.totalorder %s137, %s153
      %p155 = scmp.eq.s32.totalorder %s19, 0
      %p156 = por %p154, %p155
      %p157 = scmp.le.s32.totalorder 1, %s13
      %p158 = scmp.lt.s32.totalorder %s13, 3
      %p159 = pnand %p157, %p158
      %p160 = pneg %p159
      // Predicated region
      $region9: #{out_sigmoid_forward.1} parent=5 // pred_check
        _
      $region10: #{out_sigmoid_forward.1} parent=5 // pred_check_branch
        %162 = sbr.rel (%p159) target = $region12
      $region11: #{out_sigmoid_forward.1} parent=5 // pred_region
        %s163 = ssub.s32 %s13, 1
        // Predicated region
        $region13: #{out_sigmoid_forward.1} parent=11 // pred_check
          %p164 = pneg %p60
        $region14: #{out_sigmoid_forward.1} parent=11 // pred_check_branch
          %166 = sbr.rel (%p164) target = $region16
        $region15: #{out_sigmoid_forward.1} parent=11 // pred_region
          _
        $region16: #{out_sigmoid_forward.1} parent=11 // pred_fallthru
          _
        // Predicated region
        $region17: #{out_sigmoid_forward.1} parent=11 // pred_check
          %p167 = pneg %p81
        $region18: #{out_sigmoid_forward.1} parent=11 // pred_check_branch
          %169 = sbr.rel (%p167) target = $region20
        $region19: #{out_sigmoid_forward.1} parent=11 // pred_region
          _
        $region20: #{out_sigmoid_forward.1} parent=11 // pred_fallthru
          _
        // Predicated region
        $region21: #{out_sigmoid_forward.1} parent=11 // pred_check
          %p170 = pneg %p102
        $region22: #{out_sigmoid_forward.1} parent=11 // pred_check_branch
          %172 = sbr.rel (%p170) target = $region24
        $region23: #{out_sigmoid_forward.1} parent=11 // pred_region
          _
        $region24: #{out_sigmoid_forward.1} parent=11 // pred_fallthru
          _
        // Predicated region
        $region25: #{out_sigmoid_forward.1} parent=11 // pred_check
          %p173 = pneg %p123
        $region26: #{out_sigmoid_forward.1} parent=11 // pred_check_branch
          %175 = sbr.rel (%p173) target = $region28
        $region27: #{out_sigmoid_forward.1} parent=11 // pred_region
          _
        $region28: #{out_sigmoid_forward.1} parent=11 // pred_fallthru
          _
      $region12: #{out_sigmoid_forward.1} parent=5 // pred_fallthru
        _
      %p176 = scmp.lt.s32.totalorder %s13, 2
      // Predicated region
      $region29: #{out_sigmoid_forward.1} parent=5 // pred_check
        %p177 = pneg %p176
      $region30: #{out_sigmoid_forward.1} parent=5 // pred_check_branch
        %179 = sbr.rel (%p177) target = $region32
      $region31: #{out_sigmoid_forward.1} parent=5 // pred_region
        // Predicated region
        $region33: #{out_sigmoid_forward.1} parent=31 // pred_check
          %p180 = pneg %p33
        $region34: #{out_sigmoid_forward.1} parent=31 // pred_check_branch
          %182 = sbr.rel (%p180) target = $region36
        $region35: #{out_sigmoid_forward.1} parent=31 // pred_region
          %s183 = sand.u32 %s23, 1
          %s184 = sand.u32 %s23, 1
          %s185 = smul.addr %s184, 40
          %s186 = scalar_lea.vmem [#allocation3], %s185
          %s187 = smul.u32 2, %s13
          %s188 = smul.addr %s187, 4
          %s189 = scalar_lea.vmem %s0, %s188
          // Predicated region
          $region37: #{out_sigmoid_forward.1} parent=35 // pred_check
            _
          $region38: #{out_sigmoid_forward.1} parent=35 // pred_check_branch
            %191 = sbr.rel (0) target = $region40
          $region39: #{out_sigmoid_forward.1} parent=35 // pred_region
            // Predicated region
            $region41: #{out_sigmoid_forward.1} parent=39 // pred_check
              _
            $region42: #{out_sigmoid_forward.1} parent=39 // pred_check_branch
              %193 = sbr.rel (0) target = $region44
            $region43: #{out_sigmoid_forward.1} parent=39 // pred_region
              // Predicated region
              $region56: #{out_sigmoid_forward.1} parent=43 // pred_check
                _
              $region57: #{out_sigmoid_forward.1} parent=43 // pred_check_branch
                %216 = sbr.rel (0) target = $region59
              $region58: #{out_sigmoid_forward.1} parent=43 // pred_region
                loop: start=0, step=1, limit=1
                $region60: #{out_sigmoid_forward.1} parent=58 // loop_pre_header
                  _
                $region61: #{out_sigmoid_forward.1} parent=58 // loop_header
                  %s218 = sphi 0, %s222
                  %p219 = scmp.ge.s32.totalorder %s218, 1
                  %s223 = sphi %s189, %s189
                  %s224 = sphi %s186, %s186
                $region62: #{out_sigmoid_forward.1} parent=58 // loop_header_branch
                  %221 = sbr.rel (%p219) target = $region66
                $region63: #{out_sigmoid_forward.1} parent=58 // loop_body
                  %v225 = vld [vmem:[%s223] sm:$0xff]
                  %226 = vst [vmem:[%s224] sm:$0xff] %v225
                  %v227 = vld [vmem:[%s223 + $0x10] sm:$0xff]
                  %228 = vst [vmem:[%s224 + $0x8] sm:$0xff] %v227
                  %v229 = vld [vmem:[%s223 + $0x20] sm:$0xff]
                  %230 = vst [vmem:[%s224 + $0x10] sm:$0xff] %v229
                  %v231 = vld [vmem:[%s223 + $0x30] sm:$0xff]
                  %232 = vst [vmem:[%s224 + $0x18] sm:$0xff] %v231
                  %v233 = vld [vmem:[%s223 + $0x40] sm:$0xff]
                  %234 = vst [vmem:[%s224 + $0x20] sm:$0xff] %v233
                $region64: #{out_sigmoid_forward.1} parent=58 // loop_footer
                  %s222 = sadd.s32 1, %s218
                $region65: #{out_sigmoid_forward.1} parent=58 // loop_footer_branch
                  %217 = sbr.rel target = $region61
                $region66: #{out_sigmoid_forward.1} parent=58 // loop_exit
                  _
              $region59: #{out_sigmoid_forward.1} parent=43 // pred_fallthru
                _
              // Predicated region
              $region67: #{out_sigmoid_forward.1} parent=43 // pred_check
                _
              $region68: #{out_sigmoid_forward.1} parent=43 // pred_check_branch
                %236 = sbr.rel target = $region70
              $region69: #{out_sigmoid_forward.1} parent=43 // pred_region
                _
              $region70: #{out_sigmoid_forward.1} parent=43 // pred_fallthru
                _
            $region44: #{out_sigmoid_forward.1} parent=39 // pred_fallthru
              _
            // Predicated region
            $region45: #{out_sigmoid_forward.1} parent=39 // pred_check
              _
            $region46: #{out_sigmoid_forward.1} parent=39 // pred_check_branch
              %195 = sbr.rel target = $region48
            $region47: #{out_sigmoid_forward.1} parent=39 // pred_region
              loop: start=0, step=1, limit=1
              $region49: #{out_sigmoid_forward.1} parent=47 // loop_pre_header
                _
              $region50: #{out_sigmoid_forward.1} parent=47 // loop_header
                %s198 = sphi 0, %s202
                %p199 = scmp.ge.s32.totalorder %s198, 1
                %s203 = sphi %s189, %s189
                %s204 = sphi %s186, %s186
              $region51: #{out_sigmoid_forward.1} parent=47 // loop_header_branch
                %201 = sbr.rel (%p199) target = $region55
              $region52: #{out_sigmoid_forward.1} parent=47 // loop_body
                %v205 = vld [vmem:[%s203] sm:$0xff]
                %206 = vst [vmem:[%s204] sm:$0xff] %v205
                %v207 = vld [vmem:[%s203 + $0x10] sm:$0xff]
                %208 = vst [vmem:[%s204 + $0x8] sm:$0xff] %v207
                %v209 = vld [vmem:[%s203 + $0x20] sm:$0xff]
                %210 = vst [vmem:[%s204 + $0x10] sm:$0xff] %v209
                %v211 = vld [vmem:[%s203 + $0x30] sm:$0xff]
                %212 = vst [vmem:[%s204 + $0x18] sm:$0xff] %v211
                %v213 = vld [vmem:[%s203 + $0x40] sm:$0xff]
                %214 = vst [vmem:[%s204 + $0x20] sm:$0xff] %v213
              $region53: #{out_sigmoid_forward.1} parent=47 // loop_footer
                %s202 = sadd.s32 1, %s198
              $region54: #{out_sigmoid_forward.1} parent=47 // loop_footer_branch
                %197 = sbr.rel target = $region50
              $region55: #{out_sigmoid_forward.1} parent=47 // loop_exit
                _
            $region48: #{out_sigmoid_forward.1} parent=39 // pred_fallthru
              _
          $region40: #{out_sigmoid_forward.1} parent=35 // pred_fallthru
            _
          %237 = vnop
        $region36: #{out_sigmoid_forward.1} parent=31 // pred_fallthru
          _
      $region32: #{out_sigmoid_forward.1} parent=5 // pred_fallthru
        _
      %p238 = scmp.le.s32.totalorder 1, %s13
      %p239 = scmp.lt.s32.totalorder %s13, 3
      %p240 = pnand %p238, %p239
      %p241 = pneg %p240
      // Predicated region
      $region71: #{out_sigmoid_forward.1} parent=5 // pred_check
        _
      $region72: #{out_sigmoid_forward.1} parent=5 // pred_check_branch
        %243 = sbr.rel (%p240) target = $region74
      $region73: #{out_sigmoid_forward.1} parent=5 // pred_region
        %s244 = ssub.s32 %s13, 1
        %s245 = sand.u32 %s26, 1
        %s246 = sand.u32 %s26, 1
        %s247 = smul.addr %s246, 40
        %s248 = scalar_lea.vmem [#allocation3], %s247
        // Predicated region
        $region75: #{out_sigmoid_forward.1} parent=73 // pred_check
          %p249 = pneg %p39
        $region76: #{out_sigmoid_forward.1} parent=73 // pred_check_branch
          %251 = sbr.rel (%p249) target = $region78
        $region77: #{out_sigmoid_forward.1} parent=73 // pred_region
          _
        $region78: #{out_sigmoid_forward.1} parent=73 // pred_fallthru
          _
        %s252 = sand.u32 %s26, 1
        %s253 = sand.u32 %s26, 1
        %s254 = smul.addr %s253, 40
        %s255 = scalar_lea.vmem [#allocation3], %s254
        %p256 = pneg %p39
        %p257 = pneg %p36
        %p258 = pneg %p60
        %p259 = pneg %p57
        %p260 = pneg %p81
        %p261 = pneg %p78
        %p262 = pneg %p102
        %p263 = pneg %p99
        %p264 = pneg %p123
        %p265 = pneg %p120
        %p266 = pneg %p149
        %p267 = pneg %p146
        %s268 = smul.u32 2, %s18
        %p269 = scmp.lt.s32.totalorder %s268, 3
        %s270 = scalar_select %p269, %s268, 3
        %s271 = scalar_lea.vmem %s5, %s270
        %s272 = smul.u32 2, %s18
        %s273 = smul.u32 2, %s18
        %p274 = scmp.lt.s32.totalorder %s273, 3
        %s275 = scalar_select %p274, %s273, 3
        %s276 = scalar_lea.vmem %s5, %s275
        %s277 = smul.u32 2, %s18
        %v279 = vld [vmem:[%s1] sm:$0xf]
        %v280 = vld [vmem:[%s248] sm:$0xff]
        %v281 = vld [vmem:[%s248 + $0x8] sm:$0xff]
        %v282 = vld [vmem:[%s248 + $0x10] sm:$0xff]
        %v283 = vld [vmem:[%s248 + $0x18] sm:$0xff]
        %v284 = vld [vmem:[%s248 + $0x20] sm:$0x33]
        %v285 = vld [vmem:[%s2] sm:$0xff]
        %287 = vset.pattern.permute.xlu0 0
        %288 = vperm.xlu0 %287, %v285
        %v289 = vpop.permute.xlu0 %288
        %v296 = vunpack.c.l.b16 %v280
        %v297 = vunpack.c.h.b16 %v280
        %v298 = vunpack.c.l.b16 %v281
        %v299 = vunpack.c.h.b16 %v281
        %v300 = vunpack.c.l.b16 %v282
        %v301 = vunpack.c.h.b16 %v282
        %v302 = vunpack.c.l.b16 %v283
        %v303 = vunpack.c.h.b16 %v283
        %v304 = vunpack.c.l.b16 %v284
        %v305 = vunpack.c.h.b16 %v284
        %v306 = vpack.c.b16 %v298, %v296
        %v307 = vpack.c.b16 %v299, %v297
        %v308 = vpack.c.b16 %v302, %v300
        %v309 = vpack.c.b16 %v303, %v301
        %v310 = vpack.c.b16 %v304, %v304
        %v311 = vpack.c.b16 %v305, %v305
        %vm316 = vcmask 293888
        %v318 = vsel %vm316, %v279, 0
        %vm320 = vcmask 1041408
        %v322 = vsel %vm320, %v310, 0
        %v325 = vsel %vm320, %v311, 0
        %327 = vmatprep.subr.bf16.mxu0 %v307
        %328 = vmatpush1.bf16.msra.mxu0 %v306
        %329 = vmatprep.subr.bf16.mxu0 %v309
        %330 = vmatpush1.bf16.msra.mxu0 %v308
        %331 = vmatprep.subr.bf16.mxu0 %v325
        %332 = vmatpush1.bf16.msra.mxu0 %v322
        %333 = vmatprep.subr.bf16.mxu0 0
        %334 = vmatpush1.bf16.msra.mxu0 0
        %335 = vmatprep.subr.bf16.mxu0 0
        %336 = vmatpush1.bf16.msra.mxu0 0
        %337 = vmatprep.subr.bf16.mxu0 0
        %338 = vmatpush1.bf16.msra.mxu0 0
        %339 = vmatprep.subr.bf16.mxu0 0
        %340 = vmatpush1.bf16.msra.mxu0 0
        %341 = vmatprep.subr.bf16.mxu0 0
        %342 = vmatpush1.bf16.msra.mxu0 0
        %343 = vmatprep.subr.bf16.mxu0 0
        %344 = vmatpush1.bf16.msra.mxu0 0
        %345 = vmatprep.subr.bf16.mxu0 0
        %346 = vmatpush1.bf16.msra.mxu0 0
        %347 = vmatprep.subr.bf16.mxu0 0
        %348 = vmatpush1.bf16.msra.mxu0 0
        %349 = vmatprep.subr.bf16.mxu0 0
        %350 = vmatpush1.bf16.msra.mxu0 0
        %351 = vmatprep.subr.bf16.mxu0 0
        %352 = vmatpush1.bf16.msra.mxu0 0
        %353 = vmatprep.subr.bf16.mxu0 0
        %354 = vmatpush1.bf16.msra.mxu0 0
        %355 = vmatprep.subr.bf16.mxu0 0
        %356 = vmatpush1.bf16.msra.mxu0 0
        %357 = vmatprep.subr.bf16.mxu0 0
        %358 = vmatpush1.bf16.msra.mxu0 0
        %359 = vmatprep.mubr.bf16.mxu0 0
        %360 = vmatmul.mubr.bf16.gmra.mrb[0].mxu0 %v318
        %v361 = vpop.f32.mrb[0].mxu0
        %v362 = vadd.f32 %v289, %v361
        %v363 = vpop.f32.mrb[0].mxu0
        %v364 = vadd.f32 %v289, %v363
        %v365 = vpop.f32.mrb[0].mxu0
        %v366 = vpop.f32.mrb[0].mxu0
        %367 = vdwg.mxu0
        %v368 = vld [vmem:[%s3] sm:$0xff]
        %370 = vset.pattern.permute.xlu0 0
        %371 = vperm.xlu0 %370, %v368
        %v372 = vpop.permute.xlu0 %371
        %v374 = vmul.f32 %v362, %v372
        %v375 = vmul.f32 %v364, %v372
        %v376 = vrot.slane %v374, 4
        %v377 = vadd.f32 %v374, %v376
        %v378 = vrot.slane %v377, 2
        %v379 = vadd.f32 %v377, %v378
        %v380 = vrot.slane %v379, 1
        %v381 = vadd.f32 %v379, %v380
        %v382 = vrot.slane %v375, 4
        %v383 = vadd.f32 %v375, %v382
        %v384 = vrot.slane %v383, 2
        %v385 = vadd.f32 %v383, %v384
        %v386 = vrot.slane %v385, 1
        %v387 = vadd.f32 %v385, %v386
        %v388 = vld [vmem:[#allocation2] sm:$0x1]
        %390 = vset.pattern.permute.xlu0 0
        %391 = vperm.xlu0 %390, %v388
        %v392 = vpop.permute.xlu0 %391
        %v394 = vlaneseq
        %v395 = vshrl.u32 %v394, 7
        %v396 = vsub.s32 0, %v395
        %v397 = vrot.slane %v392, %v396
        %v398 = vadd.f32 %v381, %v397
        %v399 = vadd.f32 %v387, %v397
        %v400 = vand.u32 2147483647, %v398
        %v401 = vand.u32 2147483647, %v399
        %v402 = vsub.f32 0.0, %v400
        %v403 = vsub.f32 0.0, %v401
        %v404 = vmul.f32 %v402, 1.442695
        %v405 = vpow.pop %v404
        %v406 = vmul.f32 %v403, 1.442695
        %v407 = vpow.pop %v406
        %vm408 = vcmp.ge.f32.partialorder %v398, 0.0
        %vm409 = vcmp.ge.f32.partialorder %v399, 0.0
        %v410 = vadd.f32 %v405, 1.0
        %v411 = vadd.f32 %v407, 1.0
        %v412 = vrcp.pop %v410
        %v413 = vmul.f32 1.0, %v412
        %v414 = vrcp.pop %v411
        %v415 = vmul.f32 1.0, %v414
        %v416 = vmul.f32 %v405, %v412
        %v417 = vmul.f32 %v407, %v414
        %v418 = vsel %vm408, %v413, %v416
        %v419 = vsel %vm409, %v415, %v417
        %v422 = vcombine.low %v418, %v419
        %v424 = vunpack.c.l.s4 1966171168
        %v425 = vunpack.c.0.s8 %v424
        %v426 = vlaneseq
        %v427 = vshrl.u32 %v426, 7
        %v428 = vsub.s32 %v425, %v427
        %v429 = vrot.slane %v422, %v428
        %v431 = vunpack.c.l.s4 1966171168
        %v432 = vunpack.c.0.s8 %v431
        %v433 = vlaneseq
        %v434 = vshrl.u32 %v433, 7
        %v435 = vsub.s32 %v432, %v434
        %v436 = vrot.slane %v429, %v435
        %v438 = vlaneseq
        %vm439 = vcmp.ge.s32.totalorder %v438, 0
        %vm440 = vcmp.lt.s32.totalorder %v438, 256
        %vm441 = vmand %vm439, %vm440
        %442 = vst.msk [vmem:[%s276] sm:$0x3] %vm441, %v436
        %s443 = smul.u32 2, %s18
        %p444 = scmp.lt.s32.totalorder %s443, 3
        %s445 = scalar_select %p444, %s443, 3
        %s446 = scalar_lea.vmem %s5, %s445
        // Predicated region
        $region79: #{out_sigmoid_forward.1} parent=73 // pred_check
          %p447 = pneg %p146
        $region80: #{out_sigmoid_forward.1} parent=73 // pred_check_branch
          %449 = sbr.rel (%p447) target = $region82
        $region81: #{out_sigmoid_forward.1} parent=73 // pred_region
          %s450 = smul.u32 2, %s18
        $region82: #{out_sigmoid_forward.1} parent=73 // pred_fallthru
          _
      $region74: #{out_sigmoid_forward.1} parent=5 // pred_fallthru
        _
      %p451 = scmp.le.s32.totalorder 2, %s13
      // Predicated region
      $region83: #{out_sigmoid_forward.1} parent=5 // pred_check
        %p452 = pneg %p451
      $region84: #{out_sigmoid_forward.1} parent=5 // pred_check_branch
        %454 = sbr.rel (%p452) target = $region86
      $region85: #{out_sigmoid_forward.1} parent=5 // pred_region
        %s455 = ssub.s32 %s13, 2
        // Predicated region
        $region87: #{out_sigmoid_forward.1} parent=85 // pred_check
          %p456 = pneg %p152
        $region88: #{out_sigmoid_forward.1} parent=85 // pred_check_branch
          %458 = sbr.rel (%p456) target = $region90
        $region89: #{out_sigmoid_forward.1} parent=85 // pred_region
          %s459 = smul.u32 2, %s19
          %p460 = scmp.lt.s32.totalorder %s459, 3
          %s461 = scalar_select %p460, %s459, 3
          %s462 = scalar_lea.vmem %s5, %s461
        $region90: #{out_sigmoid_forward.1} parent=85 // pred_fallthru
          _
      $region86: #{out_sigmoid_forward.1} parent=5 // pred_fallthru
        _
    $region6: #{out_sigmoid_forward.1} parent=1 // loop_footer
      %s17 = sadd.s32 1, %s13
    $region7: #{out_sigmoid_forward.1} parent=1 // loop_footer_branch
      %12 = sbr.rel target = $region3
    $region8: #{out_sigmoid_forward.1} parent=1 // loop_exit
      _

</llo_original>
